<compile_context>
chip_gen: v7x
topology: tpu7x:2x2x1
jax: 0.10.0
libtpu: 0.0.40
codegen_flags: <defaults>
</compile_context>

<pallas_src>
import jax
import jax.numpy as jnp
from jax.experimental import pallas as pl
from jax.experimental.pallas import tpu as pltpu

LEAKY_SLOPE = 0.01   # nn.LeakyReLU default negative_slope
BN_EPS = 1e-5        # nn.BatchNorm1d default eps
Z_DIM = 40
PAD = 128            # lane-width padding for all working feature dims
HALF = 64            # 64-lane-aligned split point for the fused mu/logvar head

# Fixed "trial" hyperparameters (would come from trial.suggest_* in PyTorch):
LAYER_WIDTHS = (48, 40, 36, 30, 24)
DROPOUT_PS = (0.10, 0.00, 0.25, 0.15, 0.05)
NUM_LAYERS = len(LAYER_WIDTHS)


# ---------------------------------------------------------------------------
# Fused kernel: entire encoder in one gridless pallas_call
# ---------------------------------------------------------------------------
def _encoder_kernel(x_ref, w_ref, p_ref, rand_ref, z_ref):
    """Fused encoder.

    x_ref    : (N, PAD) f32            input, features zero-padded to 128 lanes
    w_ref    : (L+1, PAD, PAD) bf16    weights; slab L = fused [mu | logvar] head
    p_ref    : (3, L+1, 1, PAD) f32    [0]=Linear bias, [1]=BN gamma, [2]=BN beta
    rand_ref : (L+1, N, PAD) f32       [i<L]=dropout keep-mask scaled by 1/(1-p),
                                       [L]=N(0,1) eps for reparameterization
    z_ref    : (N, PAD) f32            lane-dense output; z lives in lanes [0, Z_DIM)
    """
    h = x_ref[...]

    for i in range(NUM_LAYERS):                      # static unrolled loop
        # Linear: bf16 MXU operands, f32 accumulation
        h = jnp.dot(h.astype(jnp.bfloat16), w_ref[i],
                    preferred_element_type=jnp.float32) + p_ref[0, i]
        # LeakyReLU
        h = jnp.where(h >= 0, h, LEAKY_SLOPE * h)
        # BatchNorm1d (training-mode batch stats), strength-reduced to h*s + t
        mean = jnp.mean(h, axis=0, keepdims=True)
        var = jnp.mean(h * h, axis=0, keepdims=True) - mean * mean
        var = jnp.maximum(var, 0.0)                  # guard f32 cancellation
        s = p_ref[1, i] * jax.lax.rsqrt(var + BN_EPS)
        t = p_ref[2, i] - mean * s
        h = h * s + t
        # Dropout: pre-scaled keep mask {0, 1/(1-p)}; statically skip p == 0
        if DROPOUT_PS[i] > 0.0:
            h = h * rand_ref[i]

    # Fused mu/logvar head: mu in lanes [0,40), logvar in lanes [64,104).
    out = jnp.dot(h.astype(jnp.bfloat16), w_ref[NUM_LAYERS],
                  preferred_element_type=jnp.float32) + p_ref[0, NUM_LAYERS]
    mu_half = out[:, :HALF]                          # 64-lane aligned slices only
    lv_half = out[:, HALF:]
    eps = rand_ref[NUM_LAYERS]
    z_half = mu_half + jnp.exp(0.5 * lv_half) * eps[:, :HALF]
    # Lane-dense 128-wide store; wrapper keeps lanes [0, Z_DIM) only.
    z_ref[...] = jnp.concatenate([z_half, lv_half], axis=-1)


def encoder_forward(params, x, key):
    n, in_f = x.shape
    x_pad = jnp.zeros((n, PAD), jnp.float32).at[:, :in_f].set(x)

    # Host-side randomness (dropout keep masks + reparameterization eps),
    # stacked into a single operand to keep the DMA prologue short.
    keys = jax.random.split(key, NUM_LAYERS + 1)
    rand = []
    for i, p in enumerate(DROPOUT_PS):
        if p > 0.0:
            keep = jax.random.bernoulli(keys[i], 1.0 - p, (n, PAD))
            rand.append(keep.astype(jnp.float32) * (1.0 / (1.0 - p)))
        else:
            rand.append(jnp.ones((n, PAD), jnp.float32))
    rand.append(jax.random.normal(keys[NUM_LAYERS], (n, PAD), jnp.float32))
    rand = jnp.stack(rand)

    z_pad = pl.pallas_call(
        _encoder_kernel,
        out_shape=jax.ShapeDtypeStruct((n, PAD), jnp.float32),
        in_specs=[
            pl.BlockSpec(memory_space=pltpu.MemorySpace.VMEM),   # x
            pl.BlockSpec(memory_space=pltpu.MemorySpace.VMEM),   # W stack (bf16)
            pl.BlockSpec(memory_space=pltpu.MemorySpace.VMEM),   # bias/gamma/beta
            pl.BlockSpec(memory_space=pltpu.MemorySpace.VMEM),   # masks + eps
        ],
        out_specs=pl.BlockSpec(memory_space=pltpu.MemorySpace.VMEM),
    )(x_pad, params["W"], params["P"], rand)
    return z_pad[:, :Z_DIM]


# ---------------------------------------------------------------------------
# Parameter construction (deterministic, PyTorch-default-style init),
# padded to 128 lanes and stacked for a short argument list.
# ---------------------------------------------------------------------------
def init_linear(key, fan_in, fan_out):
    kw, kb = jax.random.split(key)
    bound = 1.0 / float(fan_in) ** 0.5
    w = jax.random.uniform(kw, (fan_in, fan_out), jnp.float32, -bound, bound)
    b = jax.random.uniform(kb, (fan_out,), jnp.float32, -bound, bound)
    return w, b


def build_encoder_params(key, in_features):
    n_mats = NUM_LAYERS + 1
    W = jnp.zeros((n_mats, PAD, PAD), jnp.float32)
    # P[0]=Linear bias, P[1]=BN gamma, P[2]=BN beta; padded lanes stay 0.
    P = jnp.zeros((3, n_mats, 1, PAD), jnp.float32)

    feat = in_features
    for i, width in enumerate(LAYER_WIDTHS):
        key, sub = jax.random.split(key)
        w, b = init_linear(sub, feat, width)
        W = W.at[i, :feat, :width].set(w)
        P = P.at[0, i, 0, :width].set(b)
        P = P.at[1, i, 0, :width].set(1.0)       # BatchNorm1d weight init = 1
        feat = width

    # mu / logvar heads fused into one slab: mu at lanes [0,40), logvar at [64,104)
    key, kmu, klv = jax.random.split(key, 3)
    w_mu, b_mu = init_linear(kmu, feat, Z_DIM)
    w_lv, b_lv = init_linear(klv, feat, Z_DIM)
    W = W.at[NUM_LAYERS, :feat, :Z_DIM].set(w_mu)
    W = W.at[NUM_LAYERS, :feat, HALF:HALF + Z_DIM].set(w_lv)
    P = P.at[0, NUM_LAYERS, 0, :Z_DIM].set(b_mu)
    P = P.at[0, NUM_LAYERS, 0, HALF:HALF + Z_DIM].set(b_lv)

    return {"W": W.astype(jnp.bfloat16), "P": P}


# ---------------------------------------------------------------------------
if __name__ == "__main__":
    N = 8               # batch size (>1 required for BatchNorm1d batch stats)
    IN_FEATURES = 32

    root = jax.random.PRNGKey(0)
    k_x, k_params, k_rng = jax.random.split(root, 3)

    x = jax.random.normal(k_x, (N, IN_FEATURES), jnp.float32)
    params = build_encoder_params(k_params, IN_FEATURES)

    fwd = jax.jit(encoder_forward)
    z = jax.block_until_ready(fwd(params, x, k_rng))

    assert z.shape == (N, Z_DIM) and z.dtype == jnp.float32
    assert bool(jnp.all(jnp.isfinite(z)))
    print("KERNEL_OK")
</pallas_src>

<mosaic_0001>
module attributes {stable_mosaic.version = 11 : i64} {
  func.func @_encoder_kernel(%arg0: memref<8x128xf32, #tpu.memory_space<vmem>>, %arg1: memref<6x128x128xbf16, #tpu.memory_space<vmem>>, %arg2: memref<3x6x1x128xf32, #tpu.memory_space<vmem>>, %arg3: memref<6x8x128xf32, #tpu.memory_space<vmem>>, %arg4: memref<8x128xf32, #tpu.memory_space<vmem>>) attributes {dimension_semantics = [], scalar_prefetch = 0 : i64, scratch_operands = 0 : i64, tpu.core_type = #tpu.core_type<tc>} {
    %c0 = arith.constant 0 : index
    %c0_0 = arith.constant 0 : index
    %0 = vector.load %arg0[%c0, %c0_0] : memref<8x128xf32, #tpu.memory_space<vmem>>, vector<8x128xf32>
    %1 = arith.truncf %0 : vector<8x128xf32> to vector<8x128xbf16>
    %c0_1 = arith.constant 0 : index
    %c0_2 = arith.constant 0 : index
    %c0_3 = arith.constant 0 : index
    %2 = vector.load %arg1[%c0_1, %c0_2, %c0_3] : memref<6x128x128xbf16, #tpu.memory_space<vmem>>, vector<1x128x128xbf16>
    %3 = vector.shape_cast %2 : vector<1x128x128xbf16> to vector<128x128xbf16>
    %cst = arith.constant dense<0.000000e+00> : vector<8x128xf32>
    %4 = tpu.matmul %1, %3, %cst {dimension_numbers = #tpu.dot_dimension_numbers<[1], [0], [0], [1], [0, 0, 1, 1], [], []>} : vector<8x128xbf16>, vector<128x128xbf16>, vector<8x128xf32> -> vector<8x128xf32>
    %c0_4 = arith.constant 0 : index
    %c0_5 = arith.constant 0 : index
    %c0_6 = arith.constant 0 : index
    %c0_7 = arith.constant 0 : index
    %5 = vector.load %arg2[%c0_4, %c0_5, %c0_6, %c0_7] : memref<3x6x1x128xf32, #tpu.memory_space<vmem>>, vector<1x1x1x128xf32>
    %6 = vector.shape_cast %5 : vector<1x1x1x128xf32> to vector<1x128xf32>
    %7 = vector.broadcast %6 : vector<1x128xf32> to vector<8x128xf32>
    %8 = arith.addf %4, %7 : vector<8x128xf32>
    %cst_8 = arith.constant 0.000000e+00 : f32
    %9 = vector.broadcast %cst_8 : f32 to vector<8x128xf32>
    %10 = arith.cmpf oge, %8, %9 : vector<8x128xf32>
    %cst_9 = arith.constant 0.00999999977 : f32
    %11 = vector.broadcast %cst_9 : f32 to vector<8x128xf32>
    %12 = arith.mulf %11, %8 : vector<8x128xf32>
    %13 = arith.select %10, %8, %12 : vector<8x128xi1>, vector<8x128xf32>
    %cst_10 = arith.constant dense<0.000000e+00> : vector<128xf32>
    %14 = vector.multi_reduction <add>, %13, %cst_10 [0] : vector<8x128xf32> to vector<128xf32>
    %15 = vector.shape_cast %14 : vector<128xf32> to vector<1x128xf32>
    %cst_11 = arith.constant 8.000000e+00 : f32
    %16 = vector.broadcast %cst_11 : f32 to vector<1x128xf32>
    %17 = arith.divf %15, %16 : vector<1x128xf32>
    %18 = arith.mulf %13, %13 : vector<8x128xf32>
    %cst_12 = arith.constant dense<0.000000e+00> : vector<128xf32>
    %19 = vector.multi_reduction <add>, %18, %cst_12 [0] : vector<8x128xf32> to vector<128xf32>
    %20 = vector.shape_cast %19 : vector<128xf32> to vector<1x128xf32>
    %cst_13 = arith.constant 8.000000e+00 : f32
    %21 = vector.broadcast %cst_13 : f32 to vector<1x128xf32>
    %22 = arith.divf %20, %21 : vector<1x128xf32>
    %23 = arith.mulf %17, %17 : vector<1x128xf32>
    %24 = arith.subf %22, %23 : vector<1x128xf32>
    %cst_14 = arith.constant 0.000000e+00 : f32
    %25 = vector.broadcast %cst_14 : f32 to vector<1x128xf32>
    %26 = arith.maximumf %24, %25 : vector<1x128xf32>
    %c1 = arith.constant 1 : index
    %c0_15 = arith.constant 0 : index
    %c0_16 = arith.constant 0 : index
    %c0_17 = arith.constant 0 : index
    %27 = vector.load %arg2[%c1, %c0_15, %c0_16, %c0_17] : memref<3x6x1x128xf32, #tpu.memory_space<vmem>>, vector<1x1x1x128xf32>
    %28 = vector.shape_cast %27 : vector<1x1x1x128xf32> to vector<1x128xf32>
    %cst_18 = arith.constant 9.99999974E-6 : f32
    %29 = vector.broadcast %cst_18 : f32 to vector<1x128xf32>
    %30 = arith.addf %26, %29 : vector<1x128xf32>
    %31 = math.rsqrt %30 : vector<1x128xf32>
    %32 = arith.mulf %28, %31 : vector<1x128xf32>
    %c2 = arith.constant 2 : index
    %c0_19 = arith.constant 0 : index
    %c0_20 = arith.constant 0 : index
    %c0_21 = arith.constant 0 : index
    %33 = vector.load %arg2[%c2, %c0_19, %c0_20, %c0_21] : memref<3x6x1x128xf32, #tpu.memory_space<vmem>>, vector<1x1x1x128xf32>
    %34 = vector.shape_cast %33 : vector<1x1x1x128xf32> to vector<1x128xf32>
    %35 = arith.mulf %17, %32 : vector<1x128xf32>
    %36 = arith.subf %34, %35 : vector<1x128xf32>
    %37 = vector.broadcast %32 : vector<1x128xf32> to vector<8x128xf32>
    %38 = arith.mulf %13, %37 : vector<8x128xf32>
    %39 = vector.broadcast %36 : vector<1x128xf32> to vector<8x128xf32>
    %40 = arith.addf %38, %39 : vector<8x128xf32>
    %c0_22 = arith.constant 0 : index
    %c0_23 = arith.constant 0 : index
    %c0_24 = arith.constant 0 : index
    %41 = vector.load %arg3[%c0_22, %c0_23, %c0_24] : memref<6x8x128xf32, #tpu.memory_space<vmem>>, vector<1x8x128xf32>
    %42 = vector.shape_cast %41 : vector<1x8x128xf32> to vector<8x128xf32>
    %43 = arith.mulf %40, %42 : vector<8x128xf32>
    %44 = arith.truncf %43 : vector<8x128xf32> to vector<8x128xbf16>
    %c1_25 = arith.constant 1 : index
    %c0_26 = arith.constant 0 : index
    %c0_27 = arith.constant 0 : index
    %45 = vector.load %arg1[%c1_25, %c0_26, %c0_27] : memref<6x128x128xbf16, #tpu.memory_space<vmem>>, vector<1x128x128xbf16>
    %46 = vector.shape_cast %45 : vector<1x128x128xbf16> to vector<128x128xbf16>
    %cst_28 = arith.constant dense<0.000000e+00> : vector<8x128xf32>
    %47 = tpu.matmul %44, %46, %cst_28 {dimension_numbers = #tpu.dot_dimension_numbers<[1], [0], [0], [1], [0, 0, 1, 1], [], []>} : vector<8x128xbf16>, vector<128x128xbf16>, vector<8x128xf32> -> vector<8x128xf32>
    %c0_29 = arith.constant 0 : index
    %c1_30 = arith.constant 1 : index
    %c0_31 = arith.constant 0 : index
    %c0_32 = arith.constant 0 : index
    %48 = vector.load %arg2[%c0_29, %c1_30, %c0_31, %c0_32] : memref<3x6x1x128xf32, #tpu.memory_space<vmem>>, vector<1x1x1x128xf32>
    %49 = vector.shape_cast %48 : vector<1x1x1x128xf32> to vector<1x128xf32>
    %50 = vector.broadcast %49 : vector<1x128xf32> to vector<8x128xf32>
    %51 = arith.addf %47, %50 : vector<8x128xf32>
    %cst_33 = arith.constant 0.000000e+00 : f32
    %52 = vector.broadcast %cst_33 : f32 to vector<8x128xf32>
    %53 = arith.cmpf oge, %51, %52 : vector<8x128xf32>
    %cst_34 = arith.constant 0.00999999977 : f32
    %54 = vector.broadcast %cst_34 : f32 to vector<8x128xf32>
    %55 = arith.mulf %54, %51 : vector<8x128xf32>
    %56 = arith.select %53, %51, %55 : vector<8x128xi1>, vector<8x128xf32>
    %cst_35 = arith.constant dense<0.000000e+00> : vector<128xf32>
    %57 = vector.multi_reduction <add>, %56, %cst_35 [0] : vector<8x128xf32> to vector<128xf32>
    %58 = vector.shape_cast %57 : vector<128xf32> to vector<1x128xf32>
    %cst_36 = arith.constant 8.000000e+00 : f32
    %59 = vector.broadcast %cst_36 : f32 to vector<1x128xf32>
    %60 = arith.divf %58, %59 : vector<1x128xf32>
    %61 = arith.mulf %56, %56 : vector<8x128xf32>
    %cst_37 = arith.constant dense<0.000000e+00> : vector<128xf32>
    %62 = vector.multi_reduction <add>, %61, %cst_37 [0] : vector<8x128xf32> to vector<128xf32>
    %63 = vector.shape_cast %62 : vector<128xf32> to vector<1x128xf32>
    %cst_38 = arith.constant 8.000000e+00 : f32
    %64 = vector.broadcast %cst_38 : f32 to vector<1x128xf32>
    %65 = arith.divf %63, %64 : vector<1x128xf32>
    %66 = arith.mulf %60, %60 : vector<1x128xf32>
    %67 = arith.subf %65, %66 : vector<1x128xf32>
    %cst_39 = arith.constant 0.000000e+00 : f32
    %68 = vector.broadcast %cst_39 : f32 to vector<1x128xf32>
    %69 = arith.maximumf %67, %68 : vector<1x128xf32>
    %c1_40 = arith.constant 1 : index
    %c1_41 = arith.constant 1 : index
    %c0_42 = arith.constant 0 : index
    %c0_43 = arith.constant 0 : index
    %70 = vector.load %arg2[%c1_40, %c1_41, %c0_42, %c0_43] : memref<3x6x1x128xf32, #tpu.memory_space<vmem>>, vector<1x1x1x128xf32>
    %71 = vector.shape_cast %70 : vector<1x1x1x128xf32> to vector<1x128xf32>
    %cst_44 = arith.constant 9.99999974E-6 : f32
    %72 = vector.broadcast %cst_44 : f32 to vector<1x128xf32>
    %73 = arith.addf %69, %72 : vector<1x128xf32>
    %74 = math.rsqrt %73 : vector<1x128xf32>
    %75 = arith.mulf %71, %74 : vector<1x128xf32>
    %c2_45 = arith.constant 2 : index
    %c1_46 = arith.constant 1 : index
    %c0_47 = arith.constant 0 : index
    %c0_48 = arith.constant 0 : index
    %76 = vector.load %arg2[%c2_45, %c1_46, %c0_47, %c0_48] : memref<3x6x1x128xf32, #tpu.memory_space<vmem>>, vector<1x1x1x128xf32>
    %77 = vector.shape_cast %76 : vector<1x1x1x128xf32> to vector<1x128xf32>
    %78 = arith.mulf %60, %75 : vector<1x128xf32>
    %79 = arith.subf %77, %78 : vector<1x128xf32>
    %80 = vector.broadcast %75 : vector<1x128xf32> to vector<8x128xf32>
    %81 = arith.mulf %56, %80 : vector<8x128xf32>
    %82 = vector.broadcast %79 : vector<1x128xf32> to vector<8x128xf32>
    %83 = arith.addf %81, %82 : vector<8x128xf32>
    %84 = arith.truncf %83 : vector<8x128xf32> to vector<8x128xbf16>
    %c2_49 = arith.constant 2 : index
    %c0_50 = arith.constant 0 : index
    %c0_51 = arith.constant 0 : index
    %85 = vector.load %arg1[%c2_49, %c0_50, %c0_51] : memref<6x128x128xbf16, #tpu.memory_space<vmem>>, vector<1x128x128xbf16>
    %86 = vector.shape_cast %85 : vector<1x128x128xbf16> to vector<128x128xbf16>
    %cst_52 = arith.constant dense<0.000000e+00> : vector<8x128xf32>
    %87 = tpu.matmul %84, %86, %cst_52 {dimension_numbers = #tpu.dot_dimension_numbers<[1], [0], [0], [1], [0, 0, 1, 1], [], []>} : vector<8x128xbf16>, vector<128x128xbf16>, vector<8x128xf32> -> vector<8x128xf32>
    %c0_53 = arith.constant 0 : index
    %c2_54 = arith.constant 2 : index
    %c0_55 = arith.constant 0 : index
    %c0_56 = arith.constant 0 : index
    %88 = vector.load %arg2[%c0_53, %c2_54, %c0_55, %c0_56] : memref<3x6x1x128xf32, #tpu.memory_space<vmem>>, vector<1x1x1x128xf32>
    %89 = vector.shape_cast %88 : vector<1x1x1x128xf32> to vector<1x128xf32>
    %90 = vector.broadcast %89 : vector<1x128xf32> to vector<8x128xf32>
    %91 = arith.addf %87, %90 : vector<8x128xf32>
    %cst_57 = arith.constant 0.000000e+00 : f32
    %92 = vector.broadcast %cst_57 : f32 to vector<8x128xf32>
    %93 = arith.cmpf oge, %91, %92 : vector<8x128xf32>
    %cst_58 = arith.constant 0.00999999977 : f32
    %94 = vector.broadcast %cst_58 : f32 to vector<8x128xf32>
    %95 = arith.mulf %94, %91 : vector<8x128xf32>
    %96 = arith.select %93, %91, %95 : vector<8x128xi1>, vector<8x128xf32>
    %cst_59 = arith.constant dense<0.000000e+00> : vector<128xf32>
    %97 = vector.multi_reduction <add>, %96, %cst_59 [0] : vector<8x128xf32> to vector<128xf32>
    %98 = vector.shape_cast %97 : vector<128xf32> to vector<1x128xf32>
    %cst_60 = arith.constant 8.000000e+00 : f32
    %99 = vector.broadcast %cst_60 : f32 to vector<1x128xf32>
    %100 = arith.divf %98, %99 : vector<1x128xf32>
    %101 = arith.mulf %96, %96 : vector<8x128xf32>
    %cst_61 = arith.constant dense<0.000000e+00> : vector<128xf32>
    %102 = vector.multi_reduction <add>, %101, %cst_61 [0] : vector<8x128xf32> to vector<128xf32>
    %103 = vector.shape_cast %102 : vector<128xf32> to vector<1x128xf32>
    %cst_62 = arith.constant 8.000000e+00 : f32
    %104 = vector.broadcast %cst_62 : f32 to vector<1x128xf32>
    %105 = arith.divf %103, %104 : vector<1x128xf32>
    %106 = arith.mulf %100, %100 : vector<1x128xf32>
    %107 = arith.subf %105, %106 : vector<1x128xf32>
    %cst_63 = arith.constant 0.000000e+00 : f32
    %108 = vector.broadcast %cst_63 : f32 to vector<1x128xf32>
    %109 = arith.maximumf %107, %108 : vector<1x128xf32>
    %c1_64 = arith.constant 1 : index
    %c2_65 = arith.constant 2 : index
    %c0_66 = arith.constant 0 : index
    %c0_67 = arith.constant 0 : index
    %110 = vector.load %arg2[%c1_64, %c2_65, %c0_66, %c0_67] : memref<3x6x1x128xf32, #tpu.memory_space<vmem>>, vector<1x1x1x128xf32>
    %111 = vector.shape_cast %110 : vector<1x1x1x128xf32> to vector<1x128xf32>
    %cst_68 = arith.constant 9.99999974E-6 : f32
    %112 = vector.broadcast %cst_68 : f32 to vector<1x128xf32>
    %113 = arith.addf %109, %112 : vector<1x128xf32>
    %114 = math.rsqrt %113 : vector<1x128xf32>
    %115 = arith.mulf %111, %114 : vector<1x128xf32>
    %c2_69 = arith.constant 2 : index
    %c2_70 = arith.constant 2 : index
    %c0_71 = arith.constant 0 : index
    %c0_72 = arith.constant 0 : index
    %116 = vector.load %arg2[%c2_69, %c2_70, %c0_71, %c0_72] : memref<3x6x1x128xf32, #tpu.memory_space<vmem>>, vector<1x1x1x128xf32>
    %117 = vector.shape_cast %116 : vector<1x1x1x128xf32> to vector<1x128xf32>
    %118 = arith.mulf %100, %115 : vector<1x128xf32>
    %119 = arith.subf %117, %118 : vector<1x128xf32>
    %120 = vector.broadcast %115 : vector<1x128xf32> to vector<8x128xf32>
    %121 = arith.mulf %96, %120 : vector<8x128xf32>
    %122 = vector.broadcast %119 : vector<1x128xf32> to vector<8x128xf32>
    %123 = arith.addf %121, %122 : vector<8x128xf32>
    %c2_73 = arith.constant 2 : index
    %c0_74 = arith.constant 0 : index
    %c0_75 = arith.constant 0 : index
    %124 = vector.load %arg3[%c2_73, %c0_74, %c0_75] : memref<6x8x128xf32, #tpu.memory_space<vmem>>, vector<1x8x128xf32>
    %125 = vector.shape_cast %124 : vector<1x8x128xf32> to vector<8x128xf32>
    %126 = arith.mulf %123, %125 : vector<8x128xf32>
    %127 = arith.truncf %126 : vector<8x128xf32> to vector<8x128xbf16>
    %c3 = arith.constant 3 : index
    %c0_76 = arith.constant 0 : index
    %c0_77 = arith.constant 0 : index
    %128 = vector.load %arg1[%c3, %c0_76, %c0_77] : memref<6x128x128xbf16, #tpu.memory_space<vmem>>, vector<1x128x128xbf16>
    %129 = vector.shape_cast %128 : vector<1x128x128xbf16> to vector<128x128xbf16>
    %cst_78 = arith.constant dense<0.000000e+00> : vector<8x128xf32>
    %130 = tpu.matmul %127, %129, %cst_78 {dimension_numbers = #tpu.dot_dimension_numbers<[1], [0], [0], [1], [0, 0, 1, 1], [], []>} : vector<8x128xbf16>, vector<128x128xbf16>, vector<8x128xf32> -> vector<8x128xf32>
    %c0_79 = arith.constant 0 : index
    %c3_80 = arith.constant 3 : index
    %c0_81 = arith.constant 0 : index
    %c0_82 = arith.constant 0 : index
    %131 = vector.load %arg2[%c0_79, %c3_80, %c0_81, %c0_82] : memref<3x6x1x128xf32, #tpu.memory_space<vmem>>, vector<1x1x1x128xf32>
    %132 = vector.shape_cast %131 : vector<1x1x1x128xf32> to vector<1x128xf32>
    %133 = vector.broadcast %132 : vector<1x128xf32> to vector<8x128xf32>
    %134 = arith.addf %130, %133 : vector<8x128xf32>
    %cst_83 = arith.constant 0.000000e+00 : f32
    %135 = vector.broadcast %cst_83 : f32 to vector<8x128xf32>
    %136 = arith.cmpf oge, %134, %135 : vector<8x128xf32>
    %cst_84 = arith.constant 0.00999999977 : f32
    %137 = vector.broadcast %cst_84 : f32 to vector<8x128xf32>
    %138 = arith.mulf %137, %134 : vector<8x128xf32>
    %139 = arith.select %136, %134, %138 : vector<8x128xi1>, vector<8x128xf32>
    %cst_85 = arith.constant dense<0.000000e+00> : vector<128xf32>
    %140 = vector.multi_reduction <add>, %139, %cst_85 [0] : vector<8x128xf32> to vector<128xf32>
    %141 = vector.shape_cast %140 : vector<128xf32> to vector<1x128xf32>
    %cst_86 = arith.constant 8.000000e+00 : f32
    %142 = vector.broadcast %cst_86 : f32 to vector<1x128xf32>
    %143 = arith.divf %141, %142 : vector<1x128xf32>
    %144 = arith.mulf %139, %139 : vector<8x128xf32>
    %cst_87 = arith.constant dense<0.000000e+00> : vector<128xf32>
    %145 = vector.multi_reduction <add>, %144, %cst_87 [0] : vector<8x128xf32> to vector<128xf32>
    %146 = vector.shape_cast %145 : vector<128xf32> to vector<1x128xf32>
    %cst_88 = arith.constant 8.000000e+00 : f32
    %147 = vector.broadcast %cst_88 : f32 to vector<1x128xf32>
    %148 = arith.divf %146, %147 : vector<1x128xf32>
    %149 = arith.mulf %143, %143 : vector<1x128xf32>
    %150 = arith.subf %148, %149 : vector<1x128xf32>
    %cst_89 = arith.constant 0.000000e+00 : f32
    %151 = vector.broadcast %cst_89 : f32 to vector<1x128xf32>
    %152 = arith.maximumf %150, %151 : vector<1x128xf32>
    %c1_90 = arith.constant 1 : index
    %c3_91 = arith.constant 3 : index
    %c0_92 = arith.constant 0 : index
    %c0_93 = arith.constant 0 : index
    %153 = vector.load %arg2[%c1_90, %c3_91, %c0_92, %c0_93] : memref<3x6x1x128xf32, #tpu.memory_space<vmem>>, vector<1x1x1x128xf32>
    %154 = vector.shape_cast %153 : vector<1x1x1x128xf32> to vector<1x128xf32>
    %cst_94 = arith.constant 9.99999974E-6 : f32
    %155 = vector.broadcast %cst_94 : f32 to vector<1x128xf32>
    %156 = arith.addf %152, %155 : vector<1x128xf32>
    %157 = math.rsqrt %156 : vector<1x128xf32>
    %158 = arith.mulf %154, %157 : vector<1x128xf32>
    %c2_95 = arith.constant 2 : index
    %c3_96 = arith.constant 3 : index
    %c0_97 = arith.constant 0 : index
    %c0_98 = arith.constant 0 : index
    %159 = vector.load %arg2[%c2_95, %c3_96, %c0_97, %c0_98] : memref<3x6x1x128xf32, #tpu.memory_space<vmem>>, vector<1x1x1x128xf32>
    %160 = vector.shape_cast %159 : vector<1x1x1x128xf32> to vector<1x128xf32>
    %161 = arith.mulf %143, %158 : vector<1x128xf32>
    %162 = arith.subf %160, %161 : vector<1x128xf32>
    %163 = vector.broadcast %158 : vector<1x128xf32> to vector<8x128xf32>
    %164 = arith.mulf %139, %163 : vector<8x128xf32>
    %165 = vector.broadcast %162 : vector<1x128xf32> to vector<8x128xf32>
    %166 = arith.addf %164, %165 : vector<8x128xf32>
    %c3_99 = arith.constant 3 : index
    %c0_100 = arith.constant 0 : index
    %c0_101 = arith.constant 0 : index
    %167 = vector.load %arg3[%c3_99, %c0_100, %c0_101] : memref<6x8x128xf32, #tpu.memory_space<vmem>>, vector<1x8x128xf32>
    %168 = vector.shape_cast %167 : vector<1x8x128xf32> to vector<8x128xf32>
    %169 = arith.mulf %166, %168 : vector<8x128xf32>
    %170 = arith.truncf %169 : vector<8x128xf32> to vector<8x128xbf16>
    %c4 = arith.constant 4 : index
    %c0_102 = arith.constant 0 : index
    %c0_103 = arith.constant 0 : index
    %171 = vector.load %arg1[%c4, %c0_102, %c0_103] : memref<6x128x128xbf16, #tpu.memory_space<vmem>>, vector<1x128x128xbf16>
    %172 = vector.shape_cast %171 : vector<1x128x128xbf16> to vector<128x128xbf16>
    %cst_104 = arith.constant dense<0.000000e+00> : vector<8x128xf32>
    %173 = tpu.matmul %170, %172, %cst_104 {dimension_numbers = #tpu.dot_dimension_numbers<[1], [0], [0], [1], [0, 0, 1, 1], [], []>} : vector<8x128xbf16>, vector<128x128xbf16>, vector<8x128xf32> -> vector<8x128xf32>
    %c0_105 = arith.constant 0 : index
    %c4_106 = arith.constant 4 : index
    %c0_107 = arith.constant 0 : index
    %c0_108 = arith.constant 0 : index
    %174 = vector.load %arg2[%c0_105, %c4_106, %c0_107, %c0_108] : memref<3x6x1x128xf32, #tpu.memory_space<vmem>>, vector<1x1x1x128xf32>
    %175 = vector.shape_cast %174 : vector<1x1x1x128xf32> to vector<1x128xf32>
    %176 = vector.broadcast %175 : vector<1x128xf32> to vector<8x128xf32>
    %177 = arith.addf %173, %176 : vector<8x128xf32>
    %cst_109 = arith.constant 0.000000e+00 : f32
    %178 = vector.broadcast %cst_109 : f32 to vector<8x128xf32>
    %179 = arith.cmpf oge, %177, %178 : vector<8x128xf32>
    %cst_110 = arith.constant 0.00999999977 : f32
    %180 = vector.broadcast %cst_110 : f32 to vector<8x128xf32>
    %181 = arith.mulf %180, %177 : vector<8x128xf32>
    %182 = arith.select %179, %177, %181 : vector<8x128xi1>, vector<8x128xf32>
    %cst_111 = arith.constant dense<0.000000e+00> : vector<128xf32>
    %183 = vector.multi_reduction <add>, %182, %cst_111 [0] : vector<8x128xf32> to vector<128xf32>
    %184 = vector.shape_cast %183 : vector<128xf32> to vector<1x128xf32>
    %cst_112 = arith.constant 8.000000e+00 : f32
    %185 = vector.broadcast %cst_112 : f32 to vector<1x128xf32>
    %186 = arith.divf %184, %185 : vector<1x128xf32>
    %187 = arith.mulf %182, %182 : vector<8x128xf32>
    %cst_113 = arith.constant dense<0.000000e+00> : vector<128xf32>
    %188 = vector.multi_reduction <add>, %187, %cst_113 [0] : vector<8x128xf32> to vector<128xf32>
    %189 = vector.shape_cast %188 : vector<128xf32> to vector<1x128xf32>
    %cst_114 = arith.constant 8.000000e+00 : f32
    %190 = vector.broadcast %cst_114 : f32 to vector<1x128xf32>
    %191 = arith.divf %189, %190 : vector<1x128xf32>
    %192 = arith.mulf %186, %186 : vector<1x128xf32>
    %193 = arith.subf %191, %192 : vector<1x128xf32>
    %cst_115 = arith.constant 0.000000e+00 : f32
    %194 = vector.broadcast %cst_115 : f32 to vector<1x128xf32>
    %195 = arith.maximumf %193, %194 : vector<1x128xf32>
    %c1_116 = arith.constant 1 : index
    %c4_117 = arith.constant 4 : index
    %c0_118 = arith.constant 0 : index
    %c0_119 = arith.constant 0 : index
    %196 = vector.load %arg2[%c1_116, %c4_117, %c0_118, %c0_119] : memref<3x6x1x128xf32, #tpu.memory_space<vmem>>, vector<1x1x1x128xf32>
    %197 = vector.shape_cast %196 : vector<1x1x1x128xf32> to vector<1x128xf32>
    %cst_120 = arith.constant 9.99999974E-6 : f32
    %198 = vector.broadcast %cst_120 : f32 to vector<1x128xf32>
    %199 = arith.addf %195, %198 : vector<1x128xf32>
    %200 = math.rsqrt %199 : vector<1x128xf32>
    %201 = arith.mulf %197, %200 : vector<1x128xf32>
    %c2_121 = arith.constant 2 : index
    %c4_122 = arith.constant 4 : index
    %c0_123 = arith.constant 0 : index
    %c0_124 = arith.constant 0 : index
    %202 = vector.load %arg2[%c2_121, %c4_122, %c0_123, %c0_124] : memref<3x6x1x128xf32, #tpu.memory_space<vmem>>, vector<1x1x1x128xf32>
    %203 = vector.shape_cast %202 : vector<1x1x1x128xf32> to vector<1x128xf32>
    %204 = arith.mulf %186, %201 : vector<1x128xf32>
    %205 = arith.subf %203, %204 : vector<1x128xf32>
    %206 = vector.broadcast %201 : vector<1x128xf32> to vector<8x128xf32>
    %207 = arith.mulf %182, %206 : vector<8x128xf32>
    %208 = vector.broadcast %205 : vector<1x128xf32> to vector<8x128xf32>
    %209 = arith.addf %207, %208 : vector<8x128xf32>
    %c4_125 = arith.constant 4 : index
    %c0_126 = arith.constant 0 : index
    %c0_127 = arith.constant 0 : index
    %210 = vector.load %arg3[%c4_125, %c0_126, %c0_127] : memref<6x8x128xf32, #tpu.memory_space<vmem>>, vector<1x8x128xf32>
    %211 = vector.shape_cast %210 : vector<1x8x128xf32> to vector<8x128xf32>
    %212 = arith.mulf %209, %211 : vector<8x128xf32>
    %213 = arith.truncf %212 : vector<8x128xf32> to vector<8x128xbf16>
    %c5 = arith.constant 5 : index
    %c0_128 = arith.constant 0 : index
    %c0_129 = arith.constant 0 : index
    %214 = vector.load %arg1[%c5, %c0_128, %c0_129] : memref<6x128x128xbf16, #tpu.memory_space<vmem>>, vector<1x128x128xbf16>
    %215 = vector.shape_cast %214 : vector<1x128x128xbf16> to vector<128x128xbf16>
    %cst_130 = arith.constant dense<0.000000e+00> : vector<8x128xf32>
    %216 = tpu.matmul %213, %215, %cst_130 {dimension_numbers = #tpu.dot_dimension_numbers<[1], [0], [0], [1], [0, 0, 1, 1], [], []>} : vector<8x128xbf16>, vector<128x128xbf16>, vector<8x128xf32> -> vector<8x128xf32>
    %c0_131 = arith.constant 0 : index
    %c5_132 = arith.constant 5 : index
    %c0_133 = arith.constant 0 : index
    %c0_134 = arith.constant 0 : index
    %217 = vector.load %arg2[%c0_131, %c5_132, %c0_133, %c0_134] : memref<3x6x1x128xf32, #tpu.memory_space<vmem>>, vector<1x1x1x128xf32>
    %218 = vector.shape_cast %217 : vector<1x1x1x128xf32> to vector<1x128xf32>
    %219 = vector.broadcast %218 : vector<1x128xf32> to vector<8x128xf32>
    %220 = arith.addf %216, %219 : vector<8x128xf32>
    %221 = vector.extract_strided_slice %220 {offsets = [0, 0], sizes = [8, 64], strides = [1, 1]} : vector<8x128xf32> to vector<8x64xf32>
    %222 = vector.extract_strided_slice %220 {offsets = [0, 64], sizes = [8, 64], strides = [1, 1]} : vector<8x128xf32> to vector<8x64xf32>
    %c5_135 = arith.constant 5 : index
    %c0_136 = arith.constant 0 : index
    %c0_137 = arith.constant 0 : index
    %223 = vector.load %arg3[%c5_135, %c0_136, %c0_137] : memref<6x8x128xf32, #tpu.memory_space<vmem>>, vector<1x8x128xf32>
    %224 = vector.shape_cast %223 : vector<1x8x128xf32> to vector<8x128xf32>
    %cst_138 = arith.constant 5.000000e-01 : f32
    %225 = vector.broadcast %cst_138 : f32 to vector<8x64xf32>
    %226 = arith.mulf %225, %222 : vector<8x64xf32>
    %227 = math.exp %226 : vector<8x64xf32>
    %228 = vector.extract_strided_slice %224 {offsets = [0, 0], sizes = [8, 64], strides = [1, 1]} : vector<8x128xf32> to vector<8x64xf32>
    %229 = arith.mulf %227, %228 : vector<8x64xf32>
    %230 = arith.addf %221, %229 : vector<8x64xf32>
    %231 = tpu.concatenate %230, %222 in 1 : vector<8x64xf32>, vector<8x64xf32> -> vector<8x128xf32>
    %c0_139 = arith.constant 0 : index
    %c0_140 = arith.constant 0 : index
    %232 = vector.load %arg4[%c0_139, %c0_140] : memref<8x128xf32, #tpu.memory_space<vmem>>, vector<8x128xf32>
    tpu.vector_store %arg4[%c0_139, %c0_140], %231 {strides = array<i32>} : memref<8x128xf32, #tpu.memory_space<vmem>>, vector<8x128xf32>,
    return
  }
}

</mosaic_0001>

<llo_original>
// kernel: encoder_forward.3
$region0: #{encoder_forward.3}
  #allocation0 [shape = 'u32[]', space=smem, size = 0x4, offset = 0x4, fixed_abs, tag = 'smem constant byte address 0x4 - core index']
  #allocation1 [shape = 'u32[144,128]{1,0:T(1,128)}', space=vmem, size = 0x12000, scoped, tag = 'internal scratch']
  %s0 = inlined_call_operand.vmem [shape: f32[8,128], index: 0, kind: input, shape index: {}]
  %s1 = inlined_call_operand.hbm [shape: bf16[6,128,128], index: 1, kind: input, shape index: {}]
  %s2 = inlined_call_operand.vmem [shape: f32[3,6,1,128], index: 2, kind: input, shape index: {}]
  %s3 = inlined_call_operand.vmem [shape: f32[6,8,128], index: 3, kind: input, shape index: {}]
  %s4 = inlined_call_operand.hbm [shape: f32[8,128], index: 4, kind: output, shape index: {}]
  %s5 = sld [smem:[#allocation0]]
  $region30: #{encoder_forward.3} parent=0
    _
  %s7 = ssub.s32 1, %s5
  %s8 = scalar_select 0, %s7, %s5
  $region1: #{encoder_forward.3} parent=0
    #allocation2 [shape = 'u8[196608]{0}', space=vmem, size = 0x30000, scoped, tag = 'input window, operand 1, single buffered']
    #allocation3 [shape = 's32[1]{0}', space=sflag, size = 0x4, scoped, tag = 'scoped memory for encoder_forward.3']
    #allocation4 [shape = 's32[1]{0}', space=sflag, size = 0x4, scoped, tag = 'scoped memory for encoder_forward.3']
    #allocation5 [shape = 'u8[4096]{0}', space=vmem, size = 0x1000, scoped, tag = 'output window, operand 0, single buffered']
    %9 = vsyncpa [#allocation3], 0
    %10 = vsyncpa [#allocation4], 0
    // Predicated region
    $region2: #{encoder_forward.3} parent=1 // pred_check
      _
    $region3: #{encoder_forward.3} parent=1 // pred_check_branch
      %12 = sbr.rel (0) target = $region5
    $region4: #{encoder_forward.3} parent=1 // pred_region
      _
    $region5: #{encoder_forward.3} parent=1 // pred_fallthru
      _
    // Predicated region
    $region6: #{encoder_forward.3} parent=1 // pred_check
      _
    $region7: #{encoder_forward.3} parent=1 // pred_check_branch
      %14 = sbr.rel (0) target = $region9
    $region8: #{encoder_forward.3} parent=1 // pred_region
      %s16 = ssub.s32 6144, 6144
      %17 = vsyncadd [#allocation3], %s16
      %s18 = sshll.u32 [#allocation2], 4
      %s19 = int_to_ptr.vmem [resolvable:$true] %s18
      %24 = dma.hbm_to_vmem [thread:$0]  %s1, 6144, %s19, [#allocation3], 64, 64, 4
    $region9: #{encoder_forward.3} parent=1 // pred_fallthru
      _
    // Predicated region
    $region10: #{encoder_forward.3} parent=1 // pred_check
      _
    $region11: #{encoder_forward.3} parent=1 // pred_check_branch
      %26 = sbr.rel (0) target = $region13
    $region12: #{encoder_forward.3} parent=1 // pred_region
      _
    $region13: #{encoder_forward.3} parent=1 // pred_fallthru
      _
    // Predicated region
    $region14: #{encoder_forward.3} parent=1 // pred_check
      _
    $region15: #{encoder_forward.3} parent=1 // pred_check_branch
      %28 = sbr.rel (0) target = $region17
    $region16: #{encoder_forward.3} parent=1 // pred_region
      _
    $region17: #{encoder_forward.3} parent=1 // pred_fallthru
      _
    // Predicated region
    $region18: #{encoder_forward.3} parent=1 // pred_check
      _
    $region19: #{encoder_forward.3} parent=1 // pred_check_branch
      %30 = sbr.rel (0) target = $region21
    $region20: #{encoder_forward.3} parent=1 // pred_region
      %31 = dma.done [#allocation3], 6144
    $region21: #{encoder_forward.3} parent=1 // pred_fallthru
      _
    %v33 = vld [vmem:[%s0] sm:$0xff]
    %v34 = vpack.c.bf16 %v33, %v33
    %v35 = vld [vmem:[#allocation2] sm:$0xf]
    %v36 = vld [vmem:[#allocation2 + $0x4] sm:$0xf]
    %v37 = vld [vmem:[#allocation2 + $0x8] sm:$0xf]
    %v38 = vld [vmem:[#allocation2 + $0xc] sm:$0xf]
    %v39 = vld [vmem:[#allocation2 + $0x10] sm:$0xf]
    %v40 = vld [vmem:[#allocation2 + $0x14] sm:$0xf]
    %v41 = vld [vmem:[#allocation2 + $0x18] sm:$0xf]
    %v42 = vld [vmem:[#allocation2 + $0x1c] sm:$0xf]
    %v43 = vld [vmem:[#allocation2 + $0x20] sm:$0xf]
    %v44 = vld [vmem:[#allocation2 + $0x24] sm:$0xf]
    %v45 = vld [vmem:[#allocation2 + $0x28] sm:$0xf]
    %v46 = vld [vmem:[#allocation2 + $0x2c] sm:$0xf]
    %v47 = vld [vmem:[#allocation2 + $0x30] sm:$0xf]
    %v48 = vld [vmem:[#allocation2 + $0x34] sm:$0xf]
    %v49 = vld [vmem:[#allocation2 + $0x38] sm:$0xf]
    %v50 = vld [vmem:[#allocation2 + $0x3c] sm:$0xf]
    %v51 = vld [vmem:[%s2] sm:$0x1]
    %v53 = vlaneseq
    %v54 = vshrl.u32 %v53, 7
    %v55 = vsub.s32 0, %v54
    %v56 = vrot.slane %v51, %v55
    %v74 = vunpack.c.l.b16 %v35
    %v75 = vunpack.c.l.b16 %v36
    %v76 = vunpack.c.l.b16 %v37
    %v77 = vunpack.c.l.b16 %v38
    %v78 = vunpack.c.l.b16 %v39
    %v79 = vunpack.c.l.b16 %v40
    %v80 = vunpack.c.l.b16 %v41
    %v81 = vunpack.c.l.b16 %v42
    %v82 = vunpack.c.l.b16 %v43
    %v83 = vunpack.c.l.b16 %v44
    %v84 = vunpack.c.l.b16 %v45
    %v85 = vunpack.c.l.b16 %v46
    %v86 = vunpack.c.l.b16 %v47
    %v87 = vunpack.c.l.b16 %v48
    %v88 = vunpack.c.l.b16 %v49
    %v89 = vunpack.c.l.b16 %v50
    %v90 = vpack.c.b16 %v75, %v74
    %v91 = vpack.c.b16 %v77, %v76
    %v92 = vpack.c.b16 %v79, %v78
    %v93 = vpack.c.b16 %v81, %v80
    %v94 = vpack.c.b16 %v83, %v82
    %v95 = vpack.c.b16 %v85, %v84
    %v96 = vpack.c.b16 %v87, %v86
    %v97 = vpack.c.b16 %v89, %v88
    %106 = vmatprep.subr.bf16.mxu0 0
    %107 = vmatpush1.bf16.msra.mxu0 %v90
    %108 = vmatprep.subr.bf16.mxu0 0
    %109 = vmatpush1.bf16.msra.mxu0 %v91
    %110 = vmatprep.subr.bf16.mxu0 0
    %111 = vmatpush1.bf16.msra.mxu0 %v92
    %112 = vmatprep.subr.bf16.mxu0 0
    %113 = vmatpush1.bf16.msra.mxu0 %v93
    %114 = vmatprep.subr.bf16.mxu0 0
    %115 = vmatpush1.bf16.msra.mxu0 %v94
    %116 = vmatprep.subr.bf16.mxu0 0
    %117 = vmatpush1.bf16.msra.mxu0 %v95
    %118 = vmatprep.subr.bf16.mxu0 0
    %119 = vmatpush1.bf16.msra.mxu0 %v96
    %120 = vmatprep.subr.bf16.mxu0 0
    %121 = vmatpush1.bf16.msra.mxu0 %v97
    %122 = vmatprep.subr.bf16.mxu0 0
    %123 = vmatpush1.bf16.msra.mxu0 0
    %124 = vmatprep.subr.bf16.mxu0 0
    %125 = vmatpush1.bf16.msra.mxu0 0
    %126 = vmatprep.subr.bf16.mxu0 0
    %127 = vmatpush1.bf16.msra.mxu0 0
    %128 = vmatprep.subr.bf16.mxu0 0
    %129 = vmatpush1.bf16.msra.mxu0 0
    %130 = vmatprep.subr.bf16.mxu0 0
    %131 = vmatpush1.bf16.msra.mxu0 0
    %132 = vmatprep.subr.bf16.mxu0 0
    %133 = vmatpush1.bf16.msra.mxu0 0
    %134 = vmatprep.subr.bf16.mxu0 0
    %135 = vmatpush1.bf16.msra.mxu0 0
    %136 = vmatprep.subr.bf16.mxu0 0
    %137 = vmatpush1.bf16.msra.mxu0 0
    %138 = vmatprep.mubr.bf16.mxu0 0
    %139 = vmatmul.mubr.bf16.gmra.mrb[0].mxu0 %v34
    %v140 = vpop.f32.mrb[0].mxu0
    %v141 = vadd.f32 %v56, %v140
    %v142 = vpop.f32.mrb[0].mxu0
    %v143 = vpop.f32.mrb[0].mxu0
    %v144 = vpop.f32.mrb[0].mxu0
    %145 = vdwg.mxu0
    %vm146 = vcmp.ge.f32.partialorder %v141, 0.0
    %v147 = vmul.f32 %v141, 0.01
    %v148 = vsel %vm146, %v141, %v147
    %v149 = vrot.slane %v148, 4
    %v150 = vadd.f32 %v148, %v149
    %v151 = vrot.slane %v150, 2
    %v152 = vadd.f32 %v150, %v151
    %v153 = vrot.slane %v152, 1
    %v154 = vadd.f32 %v152, %v153
    %v155 = vrcp.pop 8.0
    %v156 = vmul.f32 %v154, %v155
    %v157 = vmul.f32 %v148, %v148
    %v158 = vrot.slane %v157, 4
    %v159 = vadd.f32 %v157, %v158
    %v160 = vrot.slane %v159, 2
    %v161 = vadd.f32 %v159, %v160
    %v162 = vrot.slane %v161, 1
    %v163 = vadd.f32 %v161, %v162
    %v164 = vmul.f32 %v163, %v155
    %v165 = vmul.f32 %v156, %v156
    %v166 = vsub.f32 %v164, %v165
    %v167 = vmax.f32 %v166, 0.0
    %s168 = scalar_lea.vmem %s2, 6
    %v169 = vld [vmem:[%s168] sm:$0x1]
    %v170 = vadd.f32 %v167, 1e-05
    %v171 = vrsqrt.pop %v170
    %v172 = vmul.f32 %v169, %v171
    %s173 = scalar_lea.vmem %s2, 12
    %v174 = vld [vmem:[%s173] sm:$0x1]
    %v175 = vmul.f32 %v156, %v172
    %v176 = vsub.f32 %v174, %v175
    %v178 = vlaneseq
    %v179 = vshrl.u32 %v178, 7
    %v180 = vsub.s32 0, %v179
    %v181 = vrot.slane %v172, %v180
    %v183 = vmul.f32 %v148, %v181
    %v185 = vlaneseq
    %v186 = vshrl.u32 %v185, 7
    %v187 = vsub.s32 0, %v186
    %v188 = vrot.slane %v176, %v187
    %v190 = vadd.f32 %v183, %v188
    %v191 = vld [vmem:[%s3] sm:$0xff]
    %v192 = vmul.f32 %v190, %v191
    %v193 = vpack.c.bf16 %v192, %v192
    %s194 = scalar_lea.vmem [#allocation2], 64
    %v195 = vld [vmem:[%s194] sm:$0xf]
    %v196 = vld [vmem:[%s194 + $0x4] sm:$0xf]
    %v197 = vld [vmem:[%s194 + $0x8] sm:$0xf]
    %v198 = vld [vmem:[%s194 + $0xc] sm:$0xf]
    %v199 = vld [vmem:[%s194 + $0x10] sm:$0xf]
    %v200 = vld [vmem:[%s194 + $0x14] sm:$0xf]
    %v201 = vld [vmem:[%s194 + $0x18] sm:$0xf]
    %v202 = vld [vmem:[%s194 + $0x1c] sm:$0xf]
    %v203 = vld [vmem:[%s194 + $0x20] sm:$0xf]
    %v204 = vld [vmem:[%s194 + $0x24] sm:$0xf]
    %v205 = vld [vmem:[%s194 + $0x28] sm:$0xf]
    %v206 = vld [vmem:[%s194 + $0x2c] sm:$0xf]
    %v207 = vld [vmem:[%s194 + $0x30] sm:$0xf]
    %v208 = vld [vmem:[%s194 + $0x34] sm:$0xf]
    %v209 = vld [vmem:[%s194 + $0x38] sm:$0xf]
    %v210 = vld [vmem:[%s194 + $0x3c] sm:$0xf]
    %s211 = scalar_lea.vmem %s2, 1
    %v212 = vld [vmem:[%s211] sm:$0x1]
    %v214 = vlaneseq
    %v215 = vshrl.u32 %v214, 7
    %v216 = vsub.s32 0, %v215
    %v217 = vrot.slane %v212, %v216
    %v235 = vunpack.c.l.b16 %v195
    %v236 = vunpack.c.l.b16 %v196
    %v237 = vunpack.c.l.b16 %v197
    %v238 = vunpack.c.l.b16 %v198
    %v239 = vunpack.c.l.b16 %v199
    %v240 = vunpack.c.l.b16 %v200
    %v241 = vunpack.c.l.b16 %v201
    %v242 = vunpack.c.l.b16 %v202
    %v243 = vunpack.c.l.b16 %v203
    %v244 = vunpack.c.l.b16 %v204
    %v245 = vunpack.c.l.b16 %v205
    %v246 = vunpack.c.l.b16 %v206
    %v247 = vunpack.c.l.b16 %v207
    %v248 = vunpack.c.l.b16 %v208
    %v249 = vunpack.c.l.b16 %v209
    %v250 = vunpack.c.l.b16 %v210
    %v251 = vpack.c.b16 %v236, %v235
    %v252 = vpack.c.b16 %v238, %v237
    %v253 = vpack.c.b16 %v240, %v239
    %v254 = vpack.c.b16 %v242, %v241
    %v255 = vpack.c.b16 %v244, %v243
    %v256 = vpack.c.b16 %v246, %v245
    %v257 = vpack.c.b16 %v248, %v247
    %v258 = vpack.c.b16 %v250, %v249
    %267 = vmatprep.subr.bf16.mxu0 0
    %268 = vmatpush1.bf16.msra.mxu0 %v251
    %269 = vmatprep.subr.bf16.mxu0 0
    %270 = vmatpush1.bf16.msra.mxu0 %v252
    %271 = vmatprep.subr.bf16.mxu0 0
    %272 = vmatpush1.bf16.msra.mxu0 %v253
    %273 = vmatprep.subr.bf16.mxu0 0
    %274 = vmatpush1.bf16.msra.mxu0 %v254
    %275 = vmatprep.subr.bf16.mxu0 0
    %276 = vmatpush1.bf16.msra.mxu0 %v255
    %277 = vmatprep.subr.bf16.mxu0 0
    %278 = vmatpush1.bf16.msra.mxu0 %v256
    %279 = vmatprep.subr.bf16.mxu0 0
    %280 = vmatpush1.bf16.msra.mxu0 %v257
    %281 = vmatprep.subr.bf16.mxu0 0
    %282 = vmatpush1.bf16.msra.mxu0 %v258
    %283 = vmatprep.subr.bf16.mxu0 0
    %284 = vmatpush1.bf16.msra.mxu0 0
    %285 = vmatprep.subr.bf16.mxu0 0
    %286 = vmatpush1.bf16.msra.mxu0 0
    %287 = vmatprep.subr.bf16.mxu0 0
    %288 = vmatpush1.bf16.msra.mxu0 0
    %289 = vmatprep.subr.bf16.mxu0 0
    %290 = vmatpush1.bf16.msra.mxu0 0
    %291 = vmatprep.subr.bf16.mxu0 0
    %292 = vmatpush1.bf16.msra.mxu0 0
    %293 = vmatprep.subr.bf16.mxu0 0
    %294 = vmatpush1.bf16.msra.mxu0 0
    %295 = vmatprep.subr.bf16.mxu0 0
    %296 = vmatpush1.bf16.msra.mxu0 0
    %297 = vmatprep.subr.bf16.mxu0 0
    %298 = vmatpush1.bf16.msra.mxu0 0
    %299 = vmatprep.mubr.bf16.mxu0 0
    %300 = vmatmul.mubr.bf16.gmra.mrb[0].mxu0 %v193
    %v301 = vpop.f32.mrb[0].mxu0
    %v302 = vadd.f32 %v217, %v301
    %v303 = vpop.f32.mrb[0].mxu0
    %v304 = vpop.f32.mrb[0].mxu0
    %v305 = vpop.f32.mrb[0].mxu0
    %306 = vdwg.mxu0
    %vm307 = vcmp.ge.f32.partialorder %v302, 0.0
    %v308 = vmul.f32 %v302, 0.01
    %v309 = vsel %vm307, %v302, %v308
    %v310 = vrot.slane %v309, 4
    %v311 = vadd.f32 %v309, %v310
    %v312 = vrot.slane %v311, 2
    %v313 = vadd.f32 %v311, %v312
    %v314 = vrot.slane %v313, 1
    %v315 = vadd.f32 %v313, %v314
    %v316 = vmul.f32 %v315, %v155
    %v317 = vmul.f32 %v309, %v309
    %v318 = vrot.slane %v317, 4
    %v319 = vadd.f32 %v317, %v318
    %v320 = vrot.slane %v319, 2
    %v321 = vadd.f32 %v319, %v320
    %v322 = vrot.slane %v321, 1
    %v323 = vadd.f32 %v321, %v322
    %v324 = vmul.f32 %v323, %v155
    %v325 = vmul.f32 %v316, %v316
    %v326 = vsub.f32 %v324, %v325
    %v327 = vmax.f32 %v326, 0.0
    %s328 = scalar_lea.vmem %s2, 7
    %v329 = vld [vmem:[%s328] sm:$0x1]
    %v330 = vadd.f32 %v327, 1e-05
    %v331 = vrsqrt.pop %v330
    %v332 = vmul.f32 %v329, %v331
    %s333 = scalar_lea.vmem %s2, 13
    %v334 = vld [vmem:[%s333] sm:$0x1]
    %v335 = vmul.f32 %v316, %v332
    %v336 = vsub.f32 %v334, %v335
    %v338 = vlaneseq
    %v339 = vshrl.u32 %v338, 7
    %v340 = vsub.s32 0, %v339
    %v341 = vrot.slane %v332, %v340
    %v343 = vmul.f32 %v309, %v341
    %v345 = vlaneseq
    %v346 = vshrl.u32 %v345, 7
    %v347 = vsub.s32 0, %v346
    %v348 = vrot.slane %v336, %v347
    %v350 = vadd.f32 %v343, %v348
    %v351 = vpack.c.bf16 %v350, %v350
    %s352 = scalar_lea.vmem [#allocation2], 128
    %v353 = vld [vmem:[%s352] sm:$0xf]
    %v354 = vld [vmem:[%s352 + $0x4] sm:$0xf]
    %v355 = vld [vmem:[%s352 + $0x8] sm:$0xf]
    %v356 = vld [vmem:[%s352 + $0xc] sm:$0xf]
    %v357 = vld [vmem:[%s352 + $0x10] sm:$0xf]
    %v358 = vld [vmem:[%s352 + $0x14] sm:$0xf]
    %v359 = vld [vmem:[%s352 + $0x18] sm:$0xf]
    %v360 = vld [vmem:[%s352 + $0x1c] sm:$0xf]
    %v361 = vld [vmem:[%s352 + $0x20] sm:$0xf]
    %v362 = vld [vmem:[%s352 + $0x24] sm:$0xf]
    %v363 = vld [vmem:[%s352 + $0x28] sm:$0xf]
    %v364 = vld [vmem:[%s352 + $0x2c] sm:$0xf]
    %v365 = vld [vmem:[%s352 + $0x30] sm:$0xf]
    %v366 = vld [vmem:[%s352 + $0x34] sm:$0xf]
    %v367 = vld [vmem:[%s352 + $0x38] sm:$0xf]
    %v368 = vld [vmem:[%s352 + $0x3c] sm:$0xf]
    %s369 = scalar_lea.vmem %s2, 2
    %v370 = vld [vmem:[%s369] sm:$0x1]
    %v372 = vlaneseq
    %v373 = vshrl.u32 %v372, 7
    %v374 = vsub.s32 0, %v373
    %v375 = vrot.slane %v370, %v374
    %v393 = vunpack.c.l.b16 %v353
    %v394 = vunpack.c.l.b16 %v354
    %v395 = vunpack.c.l.b16 %v355
    %v396 = vunpack.c.l.b16 %v356
    %v397 = vunpack.c.l.b16 %v357
    %v398 = vunpack.c.l.b16 %v358
    %v399 = vunpack.c.l.b16 %v359
    %v400 = vunpack.c.l.b16 %v360
    %v401 = vunpack.c.l.b16 %v361
    %v402 = vunpack.c.l.b16 %v362
    %v403 = vunpack.c.l.b16 %v363
    %v404 = vunpack.c.l.b16 %v364
    %v405 = vunpack.c.l.b16 %v365
    %v406 = vunpack.c.l.b16 %v366
    %v407 = vunpack.c.l.b16 %v367
    %v408 = vunpack.c.l.b16 %v368
    %v409 = vpack.c.b16 %v394, %v393
    %v410 = vpack.c.b16 %v396, %v395
    %v411 = vpack.c.b16 %v398, %v397
    %v412 = vpack.c.b16 %v400, %v399
    %v413 = vpack.c.b16 %v402, %v401
    %v414 = vpack.c.b16 %v404, %v403
    %v415 = vpack.c.b16 %v406, %v405
    %v416 = vpack.c.b16 %v408, %v407
    %425 = vmatprep.subr.bf16.mxu0 0
    %426 = vmatpush1.bf16.msra.mxu0 %v409
    %427 = vmatprep.subr.bf16.mxu0 0
    %428 = vmatpush1.bf16.msra.mxu0 %v410
    %429 = vmatprep.subr.bf16.mxu0 0
    %430 = vmatpush1.bf16.msra.mxu0 %v411
    %431 = vmatprep.subr.bf16.mxu0 0
    %432 = vmatpush1.bf16.msra.mxu0 %v412
    %433 = vmatprep.subr.bf16.mxu0 0
    %434 = vmatpush1.bf16.msra.mxu0 %v413
    %435 = vmatprep.subr.bf16.mxu0 0
    %436 = vmatpush1.bf16.msra.mxu0 %v414
    %437 = vmatprep.subr.bf16.mxu0 0
    %438 = vmatpush1.bf16.msra.mxu0 %v415
    %439 = vmatprep.subr.bf16.mxu0 0
    %440 = vmatpush1.bf16.msra.mxu0 %v416
    %441 = vmatprep.subr.bf16.mxu0 0
    %442 = vmatpush1.bf16.msra.mxu0 0
    %443 = vmatprep.subr.bf16.mxu0 0
    %444 = vmatpush1.bf16.msra.mxu0 0
    %445 = vmatprep.subr.bf16.mxu0 0
    %446 = vmatpush1.bf16.msra.mxu0 0
    %447 = vmatprep.subr.bf16.mxu0 0
    %448 = vmatpush1.bf16.msra.mxu0 0
    %449 = vmatprep.subr.bf16.mxu0 0
    %450 = vmatpush1.bf16.msra.mxu0 0
    %451 = vmatprep.subr.bf16.mxu0 0
    %452 = vmatpush1.bf16.msra.mxu0 0
    %453 = vmatprep.subr.bf16.mxu0 0
    %454 = vmatpush1.bf16.msra.mxu0 0
    %455 = vmatprep.subr.bf16.mxu0 0
    %456 = vmatpush1.bf16.msra.mxu0 0
    %457 = vmatprep.mubr.bf16.mxu0 0
    %458 = vmatmul.mubr.bf16.gmra.mrb[0].mxu0 %v351
    %v459 = vpop.f32.mrb[0].mxu0
    %v460 = vadd.f32 %v375, %v459
    %v461 = vpop.f32.mrb[0].mxu0
    %v462 = vpop.f32.mrb[0].mxu0
    %v463 = vpop.f32.mrb[0].mxu0
    %464 = vdwg.mxu0
    %vm465 = vcmp.ge.f32.partialorder %v460, 0.0
    %v466 = vmul.f32 %v460, 0.01
    %v467 = vsel %vm465, %v460, %v466
    %v468 = vrot.slane %v467, 4
    %v469 = vadd.f32 %v467, %v468
    %v470 = vrot.slane %v469, 2
    %v471 = vadd.f32 %v469, %v470
    %v472 = vrot.slane %v471, 1
    %v473 = vadd.f32 %v471, %v472
    %v474 = vmul.f32 %v473, %v155
    %v475 = vmul.f32 %v467, %v467
    %v476 = vrot.slane %v475, 4
    %v477 = vadd.f32 %v475, %v476
    %v478 = vrot.slane %v477, 2
    %v479 = vadd.f32 %v477, %v478
    %v480 = vrot.slane %v479, 1
    %v481 = vadd.f32 %v479, %v480
    %v482 = vmul.f32 %v481, %v155
    %v483 = vmul.f32 %v474, %v474
    %v484 = vsub.f32 %v482, %v483
    %v485 = vmax.f32 %v484, 0.0
    %s486 = scalar_lea.vmem %s2, 8
    %v487 = vld [vmem:[%s486] sm:$0x1]
    %v488 = vadd.f32 %v485, 1e-05
    %v489 = vrsqrt.pop %v488
    %v490 = vmul.f32 %v487, %v489
    %s491 = scalar_lea.vmem %s2, 14
    %v492 = vld [vmem:[%s491] sm:$0x1]
    %v493 = vmul.f32 %v474, %v490
    %v494 = vsub.f32 %v492, %v493
    %v496 = vlaneseq
    %v497 = vshrl.u32 %v496, 7
    %v498 = vsub.s32 0, %v497
    %v499 = vrot.slane %v490, %v498
    %v501 = vmul.f32 %v467, %v499
    %v503 = vlaneseq
    %v504 = vshrl.u32 %v503, 7
    %v505 = vsub.s32 0, %v504
    %v506 = vrot.slane %v494, %v505
    %v508 = vadd.f32 %v501, %v506
    %s509 = scalar_lea.vmem %s3, 16
    %v510 = vld [vmem:[%s509] sm:$0xff]
    %v511 = vmul.f32 %v508, %v510
    %v512 = vpack.c.bf16 %v511, %v511
    %s513 = scalar_lea.vmem [#allocation2], 192
    %v514 = vld [vmem:[%s513] sm:$0xf]
    %v515 = vld [vmem:[%s513 + $0x4] sm:$0xf]
    %v516 = vld [vmem:[%s513 + $0x8] sm:$0xf]
    %v517 = vld [vmem:[%s513 + $0xc] sm:$0xf]
    %v518 = vld [vmem:[%s513 + $0x10] sm:$0xf]
    %v519 = vld [vmem:[%s513 + $0x14] sm:$0xf]
    %v520 = vld [vmem:[%s513 + $0x18] sm:$0xf]
    %v521 = vld [vmem:[%s513 + $0x1c] sm:$0xf]
    %v522 = vld [vmem:[%s513 + $0x20] sm:$0xf]
    %v523 = vld [vmem:[%s513 + $0x24] sm:$0xf]
    %v524 = vld [vmem:[%s513 + $0x28] sm:$0xf]
    %v525 = vld [vmem:[%s513 + $0x2c] sm:$0xf]
    %v526 = vld [vmem:[%s513 + $0x30] sm:$0xf]
    %v527 = vld [vmem:[%s513 + $0x34] sm:$0xf]
    %v528 = vld [vmem:[%s513 + $0x38] sm:$0xf]
    %v529 = vld [vmem:[%s513 + $0x3c] sm:$0xf]
    %s530 = scalar_lea.vmem %s2, 3
    %v531 = vld [vmem:[%s530] sm:$0x1]
    %v533 = vlaneseq
    %v534 = vshrl.u32 %v533, 7
    %v535 = vsub.s32 0, %v534
    %v536 = vrot.slane %v531, %v535
    %v554 = vunpack.c.l.b16 %v514
    %v555 = vunpack.c.l.b16 %v515
    %v556 = vunpack.c.l.b16 %v516
    %v557 = vunpack.c.l.b16 %v517
    %v558 = vunpack.c.l.b16 %v518
    %v559 = vunpack.c.l.b16 %v519
    %v560 = vunpack.c.l.b16 %v520
    %v561 = vunpack.c.l.b16 %v521
    %v562 = vunpack.c.l.b16 %v522
    %v563 = vunpack.c.l.b16 %v523
    %v564 = vunpack.c.l.b16 %v524
    %v565 = vunpack.c.l.b16 %v525
    %v566 = vunpack.c.l.b16 %v526
    %v567 = vunpack.c.l.b16 %v527
    %v568 = vunpack.c.l.b16 %v528
    %v569 = vunpack.c.l.b16 %v529
    %v570 = vpack.c.b16 %v555, %v554
    %v571 = vpack.c.b16 %v557, %v556
    %v572 = vpack.c.b16 %v559, %v558
    %v573 = vpack.c.b16 %v561, %v560
    %v574 = vpack.c.b16 %v563, %v562
    %v575 = vpack.c.b16 %v565, %v564
    %v576 = vpack.c.b16 %v567, %v566
    %v577 = vpack.c.b16 %v569, %v568
    %586 = vmatprep.subr.bf16.mxu0 0
    %587 = vmatpush1.bf16.msra.mxu0 %v570
    %588 = vmatprep.subr.bf16.mxu0 0
    %589 = vmatpush1.bf16.msra.mxu0 %v571
    %590 = vmatprep.subr.bf16.mxu0 0
    %591 = vmatpush1.bf16.msra.mxu0 %v572
    %592 = vmatprep.subr.bf16.mxu0 0
    %593 = vmatpush1.bf16.msra.mxu0 %v573
    %594 = vmatprep.subr.bf16.mxu0 0
    %595 = vmatpush1.bf16.msra.mxu0 %v574
    %596 = vmatprep.subr.bf16.mxu0 0
    %597 = vmatpush1.bf16.msra.mxu0 %v575
    %598 = vmatprep.subr.bf16.mxu0 0
    %599 = vmatpush1.bf16.msra.mxu0 %v576
    %600 = vmatprep.subr.bf16.mxu0 0
    %601 = vmatpush1.bf16.msra.mxu0 %v577
    %602 = vmatprep.subr.bf16.mxu0 0
    %603 = vmatpush1.bf16.msra.mxu0 0
    %604 = vmatprep.subr.bf16.mxu0 0
    %605 = vmatpush1.bf16.msra.mxu0 0
    %606 = vmatprep.subr.bf16.mxu0 0
    %607 = vmatpush1.bf16.msra.mxu0 0
    %608 = vmatprep.subr.bf16.mxu0 0
    %609 = vmatpush1.bf16.msra.mxu0 0
    %610 = vmatprep.subr.bf16.mxu0 0
    %611 = vmatpush1.bf16.msra.mxu0 0
    %612 = vmatprep.subr.bf16.mxu0 0
    %613 = vmatpush1.bf16.msra.mxu0 0
    %614 = vmatprep.subr.bf16.mxu0 0
    %615 = vmatpush1.bf16.msra.mxu0 0
    %616 = vmatprep.subr.bf16.mxu0 0
    %617 = vmatpush1.bf16.msra.mxu0 0
    %618 = vmatprep.mubr.bf16.mxu0 0
    %619 = vmatmul.mubr.bf16.gmra.mrb[0].mxu0 %v512
    %v620 = vpop.f32.mrb[0].mxu0
    %v621 = vadd.f32 %v536, %v620
    %v622 = vpop.f32.mrb[0].mxu0
    %v623 = vpop.f32.mrb[0].mxu0
    %v624 = vpop.f32.mrb[0].mxu0
    %625 = vdwg.mxu0
    %vm626 = vcmp.ge.f32.partialorder %v621, 0.0
    %v627 = vmul.f32 %v621, 0.01
    %v628 = vsel %vm626, %v621, %v627
    %v629 = vrot.slane %v628, 4
    %v630 = vadd.f32 %v628, %v629
    %v631 = vrot.slane %v630, 2
    %v632 = vadd.f32 %v630, %v631
    %v633 = vrot.slane %v632, 1
    %v634 = vadd.f32 %v632, %v633
    %v635 = vmul.f32 %v634, %v155
    %v636 = vmul.f32 %v628, %v628
    %v637 = vrot.slane %v636, 4
    %v638 = vadd.f32 %v636, %v637
    %v639 = vrot.slane %v638, 2
    %v640 = vadd.f32 %v638, %v639
    %v641 = vrot.slane %v640, 1
    %v642 = vadd.f32 %v640, %v641
    %v643 = vmul.f32 %v642, %v155
    %v644 = vmul.f32 %v635, %v635
    %v645 = vsub.f32 %v643, %v644
    %v646 = vmax.f32 %v645, 0.0
    %s647 = scalar_lea.vmem %s2, 9
    %v648 = vld [vmem:[%s647] sm:$0x1]
    %v649 = vadd.f32 %v646, 1e-05
    %v650 = vrsqrt.pop %v649
    %v651 = vmul.f32 %v648, %v650
    %s652 = scalar_lea.vmem %s2, 15
    %v653 = vld [vmem:[%s652] sm:$0x1]
    %v654 = vmul.f32 %v635, %v651
    %v655 = vsub.f32 %v653, %v654
    %v657 = vlaneseq
    %v658 = vshrl.u32 %v657, 7
    %v659 = vsub.s32 0, %v658
    %v660 = vrot.slane %v651, %v659
    %v662 = vmul.f32 %v628, %v660
    %v664 = vlaneseq
    %v665 = vshrl.u32 %v664, 7
    %v666 = vsub.s32 0, %v665
    %v667 = vrot.slane %v655, %v666
    %v669 = vadd.f32 %v662, %v667
    %s670 = scalar_lea.vmem %s3, 24
    %v671 = vld [vmem:[%s670] sm:$0xff]
    %v672 = vmul.f32 %v669, %v671
    %v673 = vpack.c.bf16 %v672, %v672
    %s674 = scalar_lea.vmem [#allocation2], 256
    %v675 = vld [vmem:[%s674] sm:$0xf]
    %v676 = vld [vmem:[%s674 + $0x4] sm:$0xf]
    %v677 = vld [vmem:[%s674 + $0x8] sm:$0xf]
    %v678 = vld [vmem:[%s674 + $0xc] sm:$0xf]
    %v679 = vld [vmem:[%s674 + $0x10] sm:$0xf]
    %v680 = vld [vmem:[%s674 + $0x14] sm:$0xf]
    %v681 = vld [vmem:[%s674 + $0x18] sm:$0xf]
    %v682 = vld [vmem:[%s674 + $0x1c] sm:$0xf]
    %v683 = vld [vmem:[%s674 + $0x20] sm:$0xf]
    %v684 = vld [vmem:[%s674 + $0x24] sm:$0xf]
    %v685 = vld [vmem:[%s674 + $0x28] sm:$0xf]
    %v686 = vld [vmem:[%s674 + $0x2c] sm:$0xf]
    %v687 = vld [vmem:[%s674 + $0x30] sm:$0xf]
    %v688 = vld [vmem:[%s674 + $0x34] sm:$0xf]
    %v689 = vld [vmem:[%s674 + $0x38] sm:$0xf]
    %v690 = vld [vmem:[%s674 + $0x3c] sm:$0xf]
    %s691 = scalar_lea.vmem %s2, 4
    %v692 = vld [vmem:[%s691] sm:$0x1]
    %v694 = vlaneseq
    %v695 = vshrl.u32 %v694, 7
    %v696 = vsub.s32 0, %v695
    %v697 = vrot.slane %v692, %v696
    %v715 = vunpack.c.l.b16 %v675
    %v716 = vunpack.c.l.b16 %v676
    %v717 = vunpack.c.l.b16 %v677
    %v718 = vunpack.c.l.b16 %v678
    %v719 = vunpack.c.l.b16 %v679
    %v720 = vunpack.c.l.b16 %v680
    %v721 = vunpack.c.l.b16 %v681
    %v722 = vunpack.c.l.b16 %v682
    %v723 = vunpack.c.l.b16 %v683
    %v724 = vunpack.c.l.b16 %v684
    %v725 = vunpack.c.l.b16 %v685
    %v726 = vunpack.c.l.b16 %v686
    %v727 = vunpack.c.l.b16 %v687
    %v728 = vunpack.c.l.b16 %v688
    %v729 = vunpack.c.l.b16 %v689
    %v730 = vunpack.c.l.b16 %v690
    %v731 = vpack.c.b16 %v716, %v715
    %v732 = vpack.c.b16 %v718, %v717
    %v733 = vpack.c.b16 %v720, %v719
    %v734 = vpack.c.b16 %v722, %v721
    %v735 = vpack.c.b16 %v724, %v723
    %v736 = vpack.c.b16 %v726, %v725
    %v737 = vpack.c.b16 %v728, %v727
    %v738 = vpack.c.b16 %v730, %v729
    %747 = vmatprep.subr.bf16.mxu0 0
    %748 = vmatpush1.bf16.msra.mxu0 %v731
    %749 = vmatprep.subr.bf16.mxu0 0
    %750 = vmatpush1.bf16.msra.mxu0 %v732
    %751 = vmatprep.subr.bf16.mxu0 0
    %752 = vmatpush1.bf16.msra.mxu0 %v733
    %753 = vmatprep.subr.bf16.mxu0 0
    %754 = vmatpush1.bf16.msra.mxu0 %v734
    %755 = vmatprep.subr.bf16.mxu0 0
    %756 = vmatpush1.bf16.msra.mxu0 %v735
    %757 = vmatprep.subr.bf16.mxu0 0
    %758 = vmatpush1.bf16.msra.mxu0 %v736
    %759 = vmatprep.subr.bf16.mxu0 0
    %760 = vmatpush1.bf16.msra.mxu0 %v737
    %761 = vmatprep.subr.bf16.mxu0 0
    %762 = vmatpush1.bf16.msra.mxu0 %v738
    %763 = vmatprep.subr.bf16.mxu0 0
    %764 = vmatpush1.bf16.msra.mxu0 0
    %765 = vmatprep.subr.bf16.mxu0 0
    %766 = vmatpush1.bf16.msra.mxu0 0
    %767 = vmatprep.subr.bf16.mxu0 0
    %768 = vmatpush1.bf16.msra.mxu0 0
    %769 = vmatprep.subr.bf16.mxu0 0
    %770 = vmatpush1.bf16.msra.mxu0 0
    %771 = vmatprep.subr.bf16.mxu0 0
    %772 = vmatpush1.bf16.msra.mxu0 0
    %773 = vmatprep.subr.bf16.mxu0 0
    %774 = vmatpush1.bf16.msra.mxu0 0
    %775 = vmatprep.subr.bf16.mxu0 0
    %776 = vmatpush1.bf16.msra.mxu0 0
    %777 = vmatprep.subr.bf16.mxu0 0
    %778 = vmatpush1.bf16.msra.mxu0 0
    %779 = vmatprep.mubr.bf16.mxu0 0
    %780 = vmatmul.mubr.bf16.gmra.mrb[0].mxu0 %v673
    %v781 = vpop.f32.mrb[0].mxu0
    %v782 = vadd.f32 %v697, %v781
    %v783 = vpop.f32.mrb[0].mxu0
    %v784 = vpop.f32.mrb[0].mxu0
    %v785 = vpop.f32.mrb[0].mxu0
    %786 = vdwg.mxu0
    %vm787 = vcmp.ge.f32.partialorder %v782, 0.0
    %v788 = vmul.f32 %v782, 0.01
    %v789 = vsel %vm787, %v782, %v788
    %v790 = vrot.slane %v789, 4
    %v791 = vadd.f32 %v789, %v790
    %v792 = vrot.slane %v791, 2
    %v793 = vadd.f32 %v791, %v792
    %v794 = vrot.slane %v793, 1
    %v795 = vadd.f32 %v793, %v794
    %v796 = vmul.f32 %v795, %v155
    %v797 = vmul.f32 %v789, %v789
    %v798 = vrot.slane %v797, 4
    %v799 = vadd.f32 %v797, %v798
    %v800 = vrot.slane %v799, 2
    %v801 = vadd.f32 %v799, %v800
    %v802 = vrot.slane %v801, 1
    %v803 = vadd.f32 %v801, %v802
    %v804 = vmul.f32 %v803, %v155
    %v805 = vmul.f32 %v796, %v796
    %v806 = vsub.f32 %v804, %v805
    %v807 = vmax.f32 %v806, 0.0
    %s808 = scalar_lea.vmem %s2, 10
    %v809 = vld [vmem:[%s808] sm:$0x1]
    %v810 = vadd.f32 %v807, 1e-05
    %v811 = vrsqrt.pop %v810
    %v812 = vmul.f32 %v809, %v811
    %s813 = scalar_lea.vmem %s2, 16
    %v814 = vld [vmem:[%s813] sm:$0x1]
    %v815 = vmul.f32 %v796, %v812
    %v816 = vsub.f32 %v814, %v815
    %v818 = vlaneseq
    %v819 = vshrl.u32 %v818, 7
    %v820 = vsub.s32 0, %v819
    %v821 = vrot.slane %v812, %v820
    %v823 = vmul.f32 %v789, %v821
    %v825 = vlaneseq
    %v826 = vshrl.u32 %v825, 7
    %v827 = vsub.s32 0, %v826
    %v828 = vrot.slane %v816, %v827
    %v830 = vadd.f32 %v823, %v828
    %s831 = scalar_lea.vmem %s3, 32
    %v832 = vld [vmem:[%s831] sm:$0xff]
    %v833 = vmul.f32 %v830, %v832
    %v834 = vpack.c.bf16 %v833, %v833
    %s835 = scalar_lea.vmem [#allocation2], 320
    %v836 = vld [vmem:[%s835] sm:$0xf]
    %v837 = vld [vmem:[%s835 + $0x4] sm:$0xf]
    %v838 = vld [vmem:[%s835 + $0x8] sm:$0xf]
    %v839 = vld [vmem:[%s835 + $0xc] sm:$0xf]
    %v840 = vld [vmem:[%s835 + $0x10] sm:$0xf]
    %v841 = vld [vmem:[%s835 + $0x14] sm:$0xf]
    %v842 = vld [vmem:[%s835 + $0x18] sm:$0xf]
    %v843 = vld [vmem:[%s835 + $0x1c] sm:$0xf]
    %v844 = vld [vmem:[%s835 + $0x20] sm:$0xf]
    %v845 = vld [vmem:[%s835 + $0x24] sm:$0xf]
    %v846 = vld [vmem:[%s835 + $0x28] sm:$0xf]
    %v847 = vld [vmem:[%s835 + $0x2c] sm:$0xf]
    %v848 = vld [vmem:[%s835 + $0x30] sm:$0xf]
    %v849 = vld [vmem:[%s835 + $0x34] sm:$0xf]
    %v850 = vld [vmem:[%s835 + $0x38] sm:$0xf]
    %v851 = vld [vmem:[%s835 + $0x3c] sm:$0xf]
    %s852 = scalar_lea.vmem %s2, 5
    %v853 = vld [vmem:[%s852] sm:$0x1]
    %v855 = vlaneseq
    %v856 = vshrl.u32 %v855, 7
    %v857 = vsub.s32 0, %v856
    %v858 = vrot.slane %v853, %v857
    %v876 = vunpack.c.l.b16 %v836
    %v877 = vunpack.c.l.b16 %v837
    %v878 = vunpack.c.l.b16 %v838
    %v879 = vunpack.c.l.b16 %v839
    %v880 = vunpack.c.l.b16 %v840
    %v881 = vunpack.c.l.b16 %v841
    %v882 = vunpack.c.l.b16 %v842
    %v883 = vunpack.c.l.b16 %v843
    %v884 = vunpack.c.l.b16 %v844
    %v885 = vunpack.c.l.b16 %v845
    %v886 = vunpack.c.l.b16 %v846
    %v887 = vunpack.c.l.b16 %v847
    %v888 = vunpack.c.l.b16 %v848
    %v889 = vunpack.c.l.b16 %v849
    %v890 = vunpack.c.l.b16 %v850
    %v891 = vunpack.c.l.b16 %v851
    %v892 = vpack.c.b16 %v877, %v876
    %v893 = vpack.c.b16 %v879, %v878
    %v894 = vpack.c.b16 %v881, %v880
    %v895 = vpack.c.b16 %v883, %v882
    %v896 = vpack.c.b16 %v885, %v884
    %v897 = vpack.c.b16 %v887, %v886
    %v898 = vpack.c.b16 %v889, %v888
    %v899 = vpack.c.b16 %v891, %v890
    %908 = vmatprep.subr.bf16.mxu0 0
    %909 = vmatpush1.bf16.msra.mxu0 %v892
    %910 = vmatprep.subr.bf16.mxu0 0
    %911 = vmatpush1.bf16.msra.mxu0 %v893
    %912 = vmatprep.subr.bf16.mxu0 0
    %913 = vmatpush1.bf16.msra.mxu0 %v894
    %914 = vmatprep.subr.bf16.mxu0 0
    %915 = vmatpush1.bf16.msra.mxu0 %v895
    %916 = vmatprep.subr.bf16.mxu0 0
    %917 = vmatpush1.bf16.msra.mxu0 %v896
    %918 = vmatprep.subr.bf16.mxu0 0
    %919 = vmatpush1.bf16.msra.mxu0 %v897
    %920 = vmatprep.subr.bf16.mxu0 0
    %921 = vmatpush1.bf16.msra.mxu0 %v898
    %922 = vmatprep.subr.bf16.mxu0 0
    %923 = vmatpush1.bf16.msra.mxu0 %v899
    %924 = vmatprep.subr.bf16.mxu0 0
    %925 = vmatpush1.bf16.msra.mxu0 0
    %926 = vmatprep.subr.bf16.mxu0 0
    %927 = vmatpush1.bf16.msra.mxu0 0
    %928 = vmatprep.subr.bf16.mxu0 0
    %929 = vmatpush1.bf16.msra.mxu0 0
    %930 = vmatprep.subr.bf16.mxu0 0
    %931 = vmatpush1.bf16.msra.mxu0 0
    %932 = vmatprep.subr.bf16.mxu0 0
    %933 = vmatpush1.bf16.msra.mxu0 0
    %934 = vmatprep.subr.bf16.mxu0 0
    %935 = vmatpush1.bf16.msra.mxu0 0
    %936 = vmatprep.subr.bf16.mxu0 0
    %937 = vmatpush1.bf16.msra.mxu0 0
    %938 = vmatprep.subr.bf16.mxu0 0
    %939 = vmatpush1.bf16.msra.mxu0 0
    %940 = vmatprep.mubr.bf16.mxu0 0
    %941 = vmatmul.mubr.bf16.gmra.mrb[0].mxu0 %v834
    %v942 = vpop.f32.mrb[0].mxu0
    %v943 = vadd.f32 %v858, %v942
    %v944 = vpop.f32.mrb[0].mxu0
    %v945 = vpop.f32.mrb[0].mxu0
    %v946 = vpop.f32.mrb[0].mxu0
    %947 = vdwg.mxu0
    %s948 = scalar_lea.vmem %s3, 40
    %v949 = vld [vmem:[%s948] sm:$0xff]
    %v950 = vmul.f32 %v943, 0.5
    %v951 = vmul.f32 %v950, 1.442695
    %v952 = vpow.pop %v951
    %954 = vrot.lane.b32.xlu0 %v949, 64
    %v955 = vpop.permute.xlu0 %954
    %v957 = vmul.f32 %v952, %v955
    %959 = vrot.lane.b32.xlu0 %v957, 64
    %v960 = vpop.permute.xlu0 %959
    %v962 = vadd.f32 %v943, %v960
    %vm963 = vcmask 523264
    %v964 = vsel %vm963, %v962, %v943
    %965 = vst [vmem:[#allocation5] sm:$0xff] %v964
    // Predicated region
    $region22: #{encoder_forward.3} parent=1 // pred_check
      _
    $region23: #{encoder_forward.3} parent=1 // pred_check_branch
      %967 = sbr.rel (0) target = $region25
    $region24: #{encoder_forward.3} parent=1 // pred_region
      %s969 = ssub.s32 128, 128
      %970 = vsyncadd [#allocation4], %s969
      %s972 = sshll.u32 [#allocation5], 4
      %s973 = int_to_ptr.vmem [resolvable:$true] %s972
      %975 = dma.vmem_to_hbm [thread:$0]  %s973, 128, %s4, [#allocation4]
    $region25: #{encoder_forward.3} parent=1 // pred_fallthru
      _
    // Predicated region
    $region26: #{encoder_forward.3} parent=1 // pred_check
      _
    $region27: #{encoder_forward.3} parent=1 // pred_check_branch
      %977 = sbr.rel (0) target = $region29
    $region28: #{encoder_forward.3} parent=1 // pred_region
      %978 = dma.done [#allocation4], 128
    $region29: #{encoder_forward.3} parent=1 // pred_fallthru
      _
    %979 = vsyncpa [#allocation3], 1
    %980 = vsyncpa [#allocation4], 1

</llo_original>
